<compile_context>
chip_gen: v7x
topology: tpu7x:2x2x1
jax: 0.10.0
libtpu: 0.0.40
codegen_flags: <defaults>
</compile_context>

<pallas_src>
import jax
import jax.numpy as jnp
from jax.experimental import pallas as pl
from jax.experimental.pallas import tpu as pltpu


def _edge_classifier_kernel(x_ref, w1_ref, b1_ref, w2_ref, b2_ref, o_ref):
    # x_ref : (tile_m, 128)     lane-dense tile of the reshaped input
    # w1_ref: (128, G*d_hid)    block-diag kron(I_G, W1^T)    (resident)
    # b1_ref: (1,  G*d_hid)     fc1 bias tiled G times        (resident)
    # w2_ref: (G*d_hid, G)      block-diag kron(I_G, W2^T)    (resident)
    # b2_ref: (1,)              fc2 bias, SMEM scalar
    # o_ref : (tile_m, G)       G per-row scalar outputs per reshaped row
    h = jnp.dot(x_ref[...], w1_ref[...], preferred_element_type=jnp.float32)
    h = jnp.maximum(h + b1_ref[...], 0.0)                    # bias + ReLU (VPU)
    out = jnp.dot(h.astype(w2_ref.dtype), w2_ref[...],
                  preferred_element_type=jnp.float32)        # 16->1 per group
    o_ref[...] = (out + b2_ref[0]).astype(o_ref.dtype)


def edge_classifier_forward(x, w1_pt, b1, w2_pt, b2, *, tile_rows=32768):
    """Fused EdgeClassifier forward.

    x:     (N, d_in) float32          (PyTorch Linear input layout)
    w1_pt: (d_hid, d_in)  fc1.weight  (PyTorch layout)
    b1:    (d_hid,)       fc1.bias
    w2_pt: (1, d_hid)     fc2.weight  (PyTorch layout)
    b2:    (1,)           fc2.bias
    returns (N, 1), same dtype as x.
    tile_rows: original x rows processed per grid step (VMEM per x/out buffer
               ≈ tile_rows * 128 B; 32768 is safe under a 32 MiB scoped VMEM
               limit on all generations; use 65536 on v7x for its ~3.2 TB/s).
    """
    N, d_in = x.shape
    d_hid = w1_pt.shape[0]
    assert w1_pt.shape == (d_hid, d_in)
    assert w2_pt.shape == (1, d_hid)

    if N == 0:                                    # degenerate-batch guard
        return jnp.zeros((0, 1), x.dtype)

    # Fold G consecutive rows into one 128-lane row (zero-copy reshape).
    # TODO(synk): add a lane-padded (tile, d_in) fallback for d_in that does
    # not divide 128 (the module's default d_in=32 gives G=4).
    assert 128 % d_in == 0, "kernel assumes input_dim divides 128"
    G = 128 // d_in

    n_grp = pl.cdiv(N, G) * G                     # round rows up to a group
    if n_grp != N:                                # copies only when N % G != 0
        x = jnp.pad(x, ((0, n_grp - N), (0, 0)))
    M = n_grp // G
    x_wide = x.reshape(M, G * d_in)               # row-major bitcast: free

    dt = x.dtype
    eye = jnp.eye(G, dtype=dt)
    w1_bd = jnp.kron(eye, w1_pt.T.astype(dt))     # (G*d_in, G*d_hid) = (128, 64)
    w2_bd = jnp.kron(eye, w2_pt.T.astype(dt))     # (G*d_hid, G)      = (64, 4)
    b1_row = jnp.tile(b1.astype(dt), G).reshape(1, G * d_hid)
    b2_s = b2.astype(dt).reshape(1)

    # Tile over reshaped rows; ragged last block is handled by Pallas
    # (OOB reads only feed discarded rows, OOB writes are dropped).
    tile_m = max(1, tile_rows // G)
    if tile_m >= M:
        tile_m = M                                # single block == full dim
    else:
        tile_m = max(8, (tile_m // 8) * 8)        # sublane-aligned tile
    grid = (pl.cdiv(M, tile_m),)

    out = pl.pallas_call(
        _edge_classifier_kernel,
        out_shape=jax.ShapeDtypeStruct((M, G), dt),
        grid_spec=pltpu.PrefetchScalarGridSpec(
            num_scalar_prefetch=0,
            grid=grid,
            in_specs=[
                pl.BlockSpec((tile_m, G * d_in), lambda i: (i, 0)),     # x tile
                pl.BlockSpec((G * d_in, G * d_hid), lambda i: (0, 0)),  # W1_bd
                pl.BlockSpec((1, G * d_hid), lambda i: (0, 0)),         # b1 row
                pl.BlockSpec((G * d_hid, G), lambda i: (0, 0)),         # W2_bd
                pl.BlockSpec(memory_space=pltpu.MemorySpace.SMEM),      # b2
            ],
            out_specs=pl.BlockSpec((tile_m, G), lambda i: (i, 0)),
        ),
        compiler_params=pltpu.CompilerParams(
            dimension_semantics=("parallel",),       # both TCs on v7x
            vmem_limit_bytes=32 * 1024 * 1024,       # covers v5e's 16 MiB default
        ),
    )(x_wide, w1_bd, b1_row, w2_bd, b2_s)

    # (M, G) row-major == per-original-row order; drop the < G padded rows.
    return out.reshape(n_grp, 1)[:N]


def _init_params(input_dim=32, intermed_dim=None, seed=42):
    """Deterministic params in PyTorch nn.Linear layout."""
    hidden = 16 if intermed_dim is None else intermed_dim
    k1, k2, k3, k4 = jax.random.split(jax.random.PRNGKey(seed), 4)
    bound1 = 1.0 / jnp.sqrt(jnp.float32(input_dim))
    bound2 = 1.0 / jnp.sqrt(jnp.float32(hidden))
    w1 = jax.random.uniform(k1, (hidden, input_dim), jnp.float32, -bound1, bound1)
    b1 = jax.random.uniform(k2, (hidden,), jnp.float32, -bound1, bound1)
    w2 = jax.random.uniform(k3, (1, hidden), jnp.float32, -bound2, bound2)
    b2 = jax.random.uniform(k4, (1,), jnp.float32, -bound2, bound2)
    return w1, b1, w2, b2


if __name__ == "__main__":
    INPUT_DIM = 32
    w1, b1, w2, b2 = _init_params(input_dim=INPUT_DIM)

    def ref(xx):  # plain-JAX reference, same semantics as the PyTorch forward
        return jnp.maximum(xx @ w1.T + b1, 0.0) @ w2.T + b2

    fwd = jax.jit(edge_classifier_forward, static_argnames=("tile_rows",))
    base_key = jax.random.PRNGKey(0)

    # (N, tile_rows) cases:
    #  - (300, 128): N % 4 == 0 (zero-copy reshape), tiny tile -> multi-step
    #    grid with a ragged last block.
    #  - (300, 32768): default large tile, single block.
    #  - (43, 32768): N % 4 != 0 -> exercises the minimal group-pad path.
    for n, tr in ((300, 128), (300, 32768), (43, 32768)):
        x = jax.random.normal(jax.random.fold_in(base_key, n),
                              (n, INPUT_DIM), jnp.float32)
        out = jax.block_until_ready(fwd(x, w1, b1, w2, b2, tile_rows=tr))
        assert out.shape == (n, 1)
        assert jnp.allclose(out, ref(x), atol=1e-5, rtol=1e-5), (
            f"mismatch for N={n}, tile_rows={tr}")

    print("KERNEL_OK")
</pallas_src>

<mosaic_0001>
module attributes {stable_mosaic.version = 11 : i64} {
  func.func @_edge_classifier_kernel(%arg0: i32, %arg1: memref<32x128xf32, #tpu.memory_space<vmem>>, %arg2: memref<128x64xf32, #tpu.memory_space<vmem>>, %arg3: memref<1x64xf32, #tpu.memory_space<vmem>>, %arg4: memref<64x4xf32, #tpu.memory_space<vmem>>, %arg5: memref<1xf32, #tpu.memory_space<smem>>, %arg6: memref<32x4xf32, #tpu.memory_space<vmem>>) attributes {dimension_semantics = [#tpu.dimension_semantics<parallel>], iteration_bounds = array<i64: 3>, scalar_prefetch = 0 : i64, scratch_operands = 0 : i64, tpu.core_type = #tpu.core_type<tc>, window_params = [{transform_indices = @transform_0, window_bounds = array<i64: 32, 128>}, {pipeline_mode = #tpu.pipeline_mode<synchronous>, transform_indices = @transform_1, window_bounds = array<i64: 128, 64>}, {pipeline_mode = #tpu.pipeline_mode<synchronous>, transform_indices = @transform_2, window_bounds = array<i64: 1, 64>}, {pipeline_mode = #tpu.pipeline_mode<synchronous>, transform_indices = @transform_3, window_bounds = array<i64: 64, 4>}, {transform_indices = @transform_4, window_bounds = array<i64: 1>}, {transform_indices = @transform_5, window_bounds = array<i64: 32, 4>}]} {
    %c0 = arith.constant 0 : index
    %c0_0 = arith.constant 0 : index
    %0 = vector.load %arg1[%c0, %c0_0] : memref<32x128xf32, #tpu.memory_space<vmem>>, vector<32x128xf32>
    %c0_1 = arith.constant 0 : index
    %c0_2 = arith.constant 0 : index
    %1 = vector.load %arg2[%c0_1, %c0_2] : memref<128x64xf32, #tpu.memory_space<vmem>>, vector<128x64xf32>
    %cst = arith.constant dense<0.000000e+00> : vector<32x64xf32>
    %2 = tpu.matmul %0, %1, %cst {dimension_numbers = #tpu.dot_dimension_numbers<[1], [0], [0], [1], [0, 0, 1, 1], [], []>} : vector<32x128xf32>, vector<128x64xf32>, vector<32x64xf32> -> vector<32x64xf32>
    %c0_3 = arith.constant 0 : index
    %c0_4 = arith.constant 0 : index
    %3 = vector.load %arg3[%c0_3, %c0_4] : memref<1x64xf32, #tpu.memory_space<vmem>>, vector<1x64xf32>
    %4 = vector.broadcast %3 : vector<1x64xf32> to vector<32x64xf32>
    %5 = arith.addf %2, %4 : vector<32x64xf32>
    %cst_5 = arith.constant 0.000000e+00 : f32
    %6 = vector.broadcast %cst_5 : f32 to vector<32x64xf32>
    %7 = arith.maximumf %5, %6 : vector<32x64xf32>
    %c0_6 = arith.constant 0 : index
    %c0_7 = arith.constant 0 : index
    %8 = vector.load %arg4[%c0_6, %c0_7] : memref<64x4xf32, #tpu.memory_space<vmem>>, vector<64x4xf32>
    %cst_8 = arith.constant dense<0.000000e+00> : vector<32x4xf32>
    %9 = tpu.matmul %7, %8, %cst_8 {dimension_numbers = #tpu.dot_dimension_numbers<[1], [0], [0], [1], [0, 0, 1, 1], [], []>} : vector<32x64xf32>, vector<64x4xf32>, vector<32x4xf32> -> vector<32x4xf32>
    %c0_9 = arith.constant 0 : index
    %10 = memref.load %arg5[%c0_9] : memref<1xf32, #tpu.memory_space<smem>>
    %11 = vector.broadcast %10 : f32 to vector<32x4xf32>
    %12 = arith.addf %9, %11 : vector<32x4xf32>
    %c0_10 = arith.constant 0 : index
    %c0_11 = arith.constant 0 : index
    %13 = vector.load %arg6[%c0_10, %c0_11] : memref<32x4xf32, #tpu.memory_space<vmem>>, vector<32x4xf32>
    tpu.vector_store %arg6[%c0_10, %c0_11], %12 {strides = array<i32>} : memref<32x4xf32, #tpu.memory_space<vmem>>, vector<32x4xf32>,
    return
  }
  func.func @transform_0(%arg0: i32) -> (i32, i32) {
    %c0_i32 = arith.constant 0 : i32
    %c0_i32_0 = arith.constant 0 : i32
    return %arg0, %c0_i32 : i32, i32
  }
  func.func @transform_1(%arg0: i32) -> (i32, i32) {
    %c0_i32 = arith.constant 0 : i32
    %c0_i32_0 = arith.constant 0 : i32
    %c0_i32_1 = arith.constant 0 : i32
    return %c0_i32, %c0_i32_0 : i32, i32
  }
  func.func @transform_2(%arg0: i32) -> (i32, i32) {
    %c0_i32 = arith.constant 0 : i32
    %c0_i32_0 = arith.constant 0 : i32
    %c0_i32_1 = arith.constant 0 : i32
    return %c0_i32, %c0_i32_0 : i32, i32
  }
  func.func @transform_3(%arg0: i32) -> (i32, i32) {
    %c0_i32 = arith.constant 0 : i32
    %c0_i32_0 = arith.constant 0 : i32
    %c0_i32_1 = arith.constant 0 : i32
    return %c0_i32, %c0_i32_0 : i32, i32
  }
  func.func @transform_4(%arg0: i32) -> i32 {
    %c0_i32 = arith.constant 0 : i32
    %c0_i32_0 = arith.constant 0 : i32
    return %c0_i32 : i32
  }
  func.func @transform_5(%arg0: i32) -> (i32, i32) {
    %c0_i32 = arith.constant 0 : i32
    %c0_i32_0 = arith.constant 0 : i32
    return %arg0, %c0_i32 : i32, i32
  }
}

</mosaic_0001>

<llo_original>
// kernel: tile.8
$region0: #{tile.8}
  #allocation0 [shape = 's32[1]{0}', space=sflag, size = 0x4, scoped, tag = 'scoped memory for tile.8']
  %s0 = inlined_call_operand.vmem [shape: f32[16], index: 0, kind: input, shape index: {}]
  %s1 = inlined_call_operand.vmem [shape: f32[4,16], index: 1, kind: output, shape index: {}]
  // Predicated region
  $region2: #{tile.8} parent=0 // pred_check
    _
  $region3: #{tile.8} parent=0 // pred_check_branch
    %3 = sbr.rel (0) target = $region5
  $region4: #{tile.8} parent=0 // pred_region
    _
  $region5: #{tile.8} parent=0 // pred_fallthru
    _
  %v4 = vld [vmem:[%s0] ss:$0 sm:$0xff]
  %5 = vst [vmem:[%s1] sm:$0xf] %v4

// kernel: tile.9
$region0: #{tile.9}
  %s0 = inlined_call_operand.vmem [shape: f32[4,16], index: 0, kind: input, shape index: {}]
  %s1 = inlined_call_operand.vmem [shape: f32[1,64], index: 1, kind: output, shape index: {}]
  $region1: #{tile.9} parent=0
    #allocation0 [shape = 'u8[4096]{0}', space=vmem, size = 0x1000, scoped, tag = 'scoped mem for output reshape']
    #allocation1 [shape = 'u8[4096]{0}', space=vmem, size = 0x1000, scoped, tag = 'scoped mem for input reshape']
    %s3 = sshllo.u32 0, 4
    %v4 = vld [vmem:[%s0] sm:%s3]
    %5 = vst [vmem:[#allocation1] sm:%s3] %v4
    %v6 = vld [vmem:[#allocation1] sm:$0x1]
    %vm7 = vcmask 130048
    %8 = vst.msk [vmem:[#allocation0] sm:$0x1] %vm7, %v6
    %s9 = scalar_lea.vmem [#allocation1], 3
    %v10 = vld [vmem:[%s9] sm:$0x1]
    %11 = vrot.lane.b32.xlu0 %v10, 48
    %v12 = vpop.permute.xlu0 %11
    %vm13 = vcmask 523648
    %14 = vst.msk [vmem:[#allocation0] sm:$0x1] %vm13, %v12
    %s15 = scalar_lea.vmem [#allocation1], 2
    %v16 = vld [vmem:[%s15] sm:$0x1]
    %17 = vrot.lane.b32.xlu0 %v16, 32
    %v18 = vpop.permute.xlu0 %17
    %vm19 = vcmask 392448
    %20 = vst.msk [vmem:[#allocation0] sm:$0x1] %vm19, %v18
    %s21 = scalar_lea.vmem [#allocation1], 1
    %v22 = vld [vmem:[%s21] sm:$0x1]
    %23 = vrot.lane.b32.xlu0 %v22, 16
    %v24 = vpop.permute.xlu0 %23
    %vm25 = vcmask 261248
    %26 = vst.msk [vmem:[#allocation0] sm:$0x1] %vm25, %v24
    %s28 = sshllo.u32 0, 1
    %v30 = vld [vmem:[#allocation0] sm:%s28]
    %s31 = sshllo.u32 0, 1
    %32 = vst [vmem:[%s1] sm:%s31] %v30

// kernel: edge_classifier_forward.1
$region0: #{edge_classifier_forward.1}
  #allocation0 [shape = 'u32[]', space=smem, size = 0x4, offset = 0x4, fixed_abs, tag = 'smem constant byte address 0x4 - core index']
  #allocation1 [shape = 'u32[144,128]{1,0:T(1,128)}', space=vmem, size = 0x12000, scoped, tag = 'internal scratch']
  #allocation2 [shape = 'f32[1]{0:T(128)S(6)}', space=smem, size = 0x200, scoped, tag = 'scoped memory for edge_classifier_forward.1']
  %s0 = inlined_call_operand.vmem [shape: f32[75,128], index: 0, kind: input, shape index: {}]
  %s1 = inlined_call_operand.vmem [shape: f32[128,64], index: 1, kind: input, shape index: {}]
  %s2 = inlined_call_operand.vmem [shape: f32[1,64], index: 2, kind: input, shape index: {}]
  %s3 = inlined_call_operand.vmem [shape: f32[64,4], index: 3, kind: input, shape index: {}]
  %s4 = inlined_call_operand.<no memory space> [shape: f32[1], index: 4, kind: input, shape index: {}]
  %s5 = inlined_call_operand.vmem [shape: f32[75,4], index: 5, kind: output, shape index: {}]
  %s6 = sld [smem:[#allocation0]]
  $region101: #{edge_classifier_forward.1} parent=0
    _
  %s8 = ssub.s32 1, %s6
  %s9 = scalar_select 0, %s8, %s6
  %10 = sst [smem:[#allocation2]] %s4
  $region1: #{edge_classifier_forward.1} parent=0
    #allocation3 [shape = 'u8[32768]{0}', space=vmem, size = 0x8000, scoped, tag = 'output window, operand 0']
    loop: start=0, step=1, limit=5
    $region2: #{edge_classifier_forward.1} parent=1 // loop_pre_header
      _
    $region3: #{edge_classifier_forward.1} parent=1 // loop_header
      %s12 = sphi 0, %s16
      %p13 = scmp.ge.s32.totalorder %s12, 5
      %s22 = sphi 0, %s24
      %s25 = sphi 0, %s22
      %s26 = sphi 0, %s25
      %s42 = sphi 0, %s26
      %s46 = sphi 0, %s46
      %s48 = sphi 0, %s46
      %s49 = sphi 0, %s48
      %s63 = sphi 0, %s49
      %s67 = sphi 0, %s67
      %s69 = sphi 0, %s67
      %s70 = sphi 0, %s69
      %s84 = sphi 0, %s70
      %s88 = sphi 0, %s88
      %s90 = sphi 0, %s88
      %s91 = sphi 0, %s90
      %s105 = sphi 0, %s91
      %s109 = sphi 0, %s109
      %s111 = sphi 0, %s109
      %s112 = sphi 0, %s111
      %s126 = sphi 0, %s112
      %s132 = sphi 0, %s134
      %s135 = sphi 0, %s132
      %s136 = sphi 0, %s135
      %s152 = sphi 0, %s136
    $region4: #{edge_classifier_forward.1} parent=1 // loop_header_branch
      %15 = sbr.rel (%p13) target = $region8
    $region5: #{edge_classifier_forward.1} parent=1 // loop_body
      %s17 = ssub.s32 %s12, 1
      %s18 = ssub.s32 %s12, 2
      %s19 = sadd.s32 %s12, 1
      %s20 = ssub.s32 %s12, %s19
      %p21 = scmp.eq.s32.totalorder %s20, 0
      %s23 = sadd.s32 %s22, 1
      %s24 = scalar_select %p21, %s22, %s23
      %p27 = pneg %p21
      %p28 = scmp.eq.s32.totalorder %s12, 2
      %p29 = por %p27, %p28
      %p30 = scmp.ne.s32.totalorder %s22, %s25
      %p31 = scmp.eq.s32.totalorder %s12, 0
      %p32 = por %p30, %p31
      %p33 = scmp.ne.s32.totalorder %s22, %s25
      %p34 = scmp.eq.s32.totalorder %s17, 2
      %p35 = por %p33, %p34
      %p36 = scmp.ne.s32.totalorder %s25, %s26
      %p37 = scmp.eq.s32.totalorder %s17, 0
      %p38 = por %p36, %p37
      %p39 = scmp.ne.s32.totalorder %s25, %s26
      %p40 = scmp.eq.s32.totalorder %s18, 2
      %p41 = por %p39, %p40
      %p43 = scmp.ne.s32.totalorder %s26, %s42
      %p44 = scmp.eq.s32.totalorder %s18, 0
      %p45 = por %p43, %p44
      %s47 = sadd.s32 %s46, 1
      %p50 = scmp.eq.s32.totalorder %s12, 2
      %p51 = scmp.ne.s32.totalorder %s46, %s48
      %p52 = scmp.eq.s32.totalorder %s12, 0
      %p53 = por %p51, %p52
      %p54 = scmp.ne.s32.totalorder %s46, %s48
      %p55 = scmp.eq.s32.totalorder %s17, 2
      %p56 = por %p54, %p55
      %p57 = scmp.ne.s32.totalorder %s48, %s49
      %p58 = scmp.eq.s32.totalorder %s17, 0
      %p59 = por %p57, %p58
      %p60 = scmp.ne.s32.totalorder %s48, %s49
      %p61 = scmp.eq.s32.totalorder %s18, 2
      %p62 = por %p60, %p61
      %p64 = scmp.ne.s32.totalorder %s49, %s63
      %p65 = scmp.eq.s32.totalorder %s18, 0
      %p66 = por %p64, %p65
      %s68 = sadd.s32 %s67, 1
      %p71 = scmp.eq.s32.totalorder %s12, 2
      %p72 = scmp.ne.s32.totalorder %s67, %s69
      %p73 = scmp.eq.s32.totalorder %s12, 0
      %p74 = por %p72, %p73
      %p75 = scmp.ne.s32.totalorder %s67, %s69
      %p76 = scmp.eq.s32.totalorder %s17, 2
      %p77 = por %p75, %p76
      %p78 = scmp.ne.s32.totalorder %s69, %s70
      %p79 = scmp.eq.s32.totalorder %s17, 0
      %p80 = por %p78, %p79
      %p81 = scmp.ne.s32.totalorder %s69, %s70
      %p82 = scmp.eq.s32.totalorder %s18, 2
      %p83 = por %p81, %p82
      %p85 = scmp.ne.s32.totalorder %s70, %s84
      %p86 = scmp.eq.s32.totalorder %s18, 0
      %p87 = por %p85, %p86
      %s89 = sadd.s32 %s88, 1
      %p92 = scmp.eq.s32.totalorder %s12, 2
      %p93 = scmp.ne.s32.totalorder %s88, %s90
      %p94 = scmp.eq.s32.totalorder %s12, 0
      %p95 = por %p93, %p94
      %p96 = scmp.ne.s32.totalorder %s88, %s90
      %p97 = scmp.eq.s32.totalorder %s17, 2
      %p98 = por %p96, %p97
      %p99 = scmp.ne.s32.totalorder %s90, %s91
      %p100 = scmp.eq.s32.totalorder %s17, 0
      %p101 = por %p99, %p100
      %p102 = scmp.ne.s32.totalorder %s90, %s91
      %p103 = scmp.eq.s32.totalorder %s18, 2
      %p104 = por %p102, %p103
      %p106 = scmp.ne.s32.totalorder %s91, %s105
      %p107 = scmp.eq.s32.totalorder %s18, 0
      %p108 = por %p106, %p107
      %s110 = sadd.s32 %s109, 1
      %p113 = scmp.eq.s32.totalorder %s12, 2
      %p114 = scmp.ne.s32.totalorder %s109, %s111
      %p115 = scmp.eq.s32.totalorder %s12, 0
      %p116 = por %p114, %p115
      %p117 = scmp.ne.s32.totalorder %s109, %s111
      %p118 = scmp.eq.s32.totalorder %s17, 2
      %p119 = por %p117, %p118
      %p120 = scmp.ne.s32.totalorder %s111, %s112
      %p121 = scmp.eq.s32.totalorder %s17, 0
      %p122 = por %p120, %p121
      %p123 = scmp.ne.s32.totalorder %s111, %s112
      %p124 = scmp.eq.s32.totalorder %s18, 2
      %p125 = por %p123, %p124
      %p127 = scmp.ne.s32.totalorder %s112, %s126
      %p128 = scmp.eq.s32.totalorder %s18, 0
      %p129 = por %p127, %p128
      %s130 = ssub.s32 %s12, %s19
      %p131 = scmp.eq.s32.totalorder %s130, 0
      %s133 = sadd.s32 %s132, 1
      %s134 = scalar_select %p131, %s132, %s133
      %p137 = pneg %p131
      %p138 = scmp.eq.s32.totalorder %s12, 2
      %p139 = por %p137, %p138
      %p140 = scmp.ne.s32.totalorder %s132, %s135
      %p141 = scmp.eq.s32.totalorder %s12, 0
      %p142 = por %p140, %p141
      %p143 = scmp.ne.s32.totalorder %s132, %s135
      %p144 = scmp.eq.s32.totalorder %s17, 2
      %p145 = por %p143, %p144
      %p146 = scmp.ne.s32.totalorder %s135, %s136
      %p147 = scmp.eq.s32.totalorder %s17, 0
      %p148 = por %p146, %p147
      %p149 = scmp.ne.s32.totalorder %s135, %s136
      %p150 = scmp.eq.s32.totalorder %s18, 2
      %p151 = por %p149, %p150
      %p153 = scmp.ne.s32.totalorder %s136, %s152
      %p154 = scmp.eq.s32.totalorder %s18, 0
      %p155 = por %p153, %p154
      %p156 = scmp.le.s32.totalorder 1, %s12
      %p157 = scmp.lt.s32.totalorder %s12, 4
      %p158 = pnand %p156, %p157
      %p159 = pneg %p158
      // Predicated region
      $region9: #{edge_classifier_forward.1} parent=5 // pred_check
        _
      $region10: #{edge_classifier_forward.1} parent=5 // pred_check_branch
        %161 = sbr.rel (%p158) target = $region12
      $region11: #{edge_classifier_forward.1} parent=5 // pred_region
        %s162 = ssub.s32 %s12, 1
        // Predicated region
        $region13: #{edge_classifier_forward.1} parent=11 // pred_check
          %p163 = pneg %p59
        $region14: #{edge_classifier_forward.1} parent=11 // pred_check_branch
          %165 = sbr.rel (%p163) target = $region16
        $region15: #{edge_classifier_forward.1} parent=11 // pred_region
          _
        $region16: #{edge_classifier_forward.1} parent=11 // pred_fallthru
          _
        // Predicated region
        $region17: #{edge_classifier_forward.1} parent=11 // pred_check
          %p166 = pneg %p80
        $region18: #{edge_classifier_forward.1} parent=11 // pred_check_branch
          %168 = sbr.rel (%p166) target = $region20
        $region19: #{edge_classifier_forward.1} parent=11 // pred_region
          _
        $region20: #{edge_classifier_forward.1} parent=11 // pred_fallthru
          _
        // Predicated region
        $region21: #{edge_classifier_forward.1} parent=11 // pred_check
          %p169 = pneg %p101
        $region22: #{edge_classifier_forward.1} parent=11 // pred_check_branch
          %171 = sbr.rel (%p169) target = $region24
        $region23: #{edge_classifier_forward.1} parent=11 // pred_region
          _
        $region24: #{edge_classifier_forward.1} parent=11 // pred_fallthru
          _
        // Predicated region
        $region25: #{edge_classifier_forward.1} parent=11 // pred_check
          %p172 = pneg %p122
        $region26: #{edge_classifier_forward.1} parent=11 // pred_check_branch
          %174 = sbr.rel (%p172) target = $region28
        $region27: #{edge_classifier_forward.1} parent=11 // pred_region
          _
        $region28: #{edge_classifier_forward.1} parent=11 // pred_fallthru
          _
      $region12: #{edge_classifier_forward.1} parent=5 // pred_fallthru
        _
      %p175 = scmp.lt.s32.totalorder %s12, 3
      // Predicated region
      $region29: #{edge_classifier_forward.1} parent=5 // pred_check
        %p176 = pneg %p175
      $region30: #{edge_classifier_forward.1} parent=5 // pred_check_branch
        %178 = sbr.rel (%p176) target = $region32
      $region31: #{edge_classifier_forward.1} parent=5 // pred_region
        // Predicated region
        $region33: #{edge_classifier_forward.1} parent=31 // pred_check
          %p179 = pneg %p32
        $region34: #{edge_classifier_forward.1} parent=31 // pred_check_branch
          %181 = sbr.rel (%p179) target = $region36
        $region35: #{edge_classifier_forward.1} parent=31 // pred_region
          %s182 = smul.u32 4, %s12
          %s183 = ssub.s32 10, %s182
          %p184 = scmp.lt.s32.totalorder %s183, 4
          %s185 = scalar_select %p184, %s183, 4
          %s186 = smul.u32 128, %s185
          %p187 = scmp.lt.s32.totalorder %s182, 9
          %s188 = scalar_select %p187, %s182, 9
          %s189 = smul.addr %s188, 8
          %s190 = scalar_lea.vmem %s0, %s189
          %s191 = smul.u32 4, %s12
          %s192 = ssub.s32 10, %s191
          %p193 = scmp.lt.s32.totalorder %s192, 4
          %s194 = scalar_select %p193, %s192, 4
          %s195 = smul.u32 128, %s194
        $region36: #{edge_classifier_forward.1} parent=31 // pred_fallthru
          _
      $region32: #{edge_classifier_forward.1} parent=5 // pred_fallthru
        _
      %p196 = scmp.le.s32.totalorder 1, %s12
      %p197 = scmp.lt.s32.totalorder %s12, 4
      %p198 = pnand %p196, %p197
      %p199 = pneg %p198
      // Predicated region
      $region37: #{edge_classifier_forward.1} parent=5 // pred_check
        _
      $region38: #{edge_classifier_forward.1} parent=5 // pred_check_branch
        %201 = sbr.rel (%p198) target = $region40
      $region39: #{edge_classifier_forward.1} parent=5 // pred_region
        %s202 = ssub.s32 %s12, 1
        %s203 = smul.u32 4, %s17
        %s204 = ssub.s32 10, %s203
        %p205 = scmp.lt.s32.totalorder %s204, 4
        %s206 = scalar_select %p205, %s204, 4
        %s207 = smul.u32 128, %s206
        %p208 = scmp.lt.s32.totalorder %s203, 9
        %s209 = scalar_select %p208, %s203, 9
        %s210 = smul.addr %s209, 8
        %s211 = scalar_lea.vmem %s0, %s210
        %p212 = pneg %p38
        %p213 = pneg %p35
        %p214 = pneg %p59
        %p215 = pneg %p56
        %p216 = pneg %p80
        %p217 = pneg %p77
        %p218 = pneg %p101
        %p219 = pneg %p98
        %p220 = pneg %p122
        %p221 = pneg %p119
        %p222 = pneg %p148
        %p223 = pneg %p145
        %s224 = sand.u32 %s135, 1
        %s225 = sand.u32 %s135, 1
        %s226 = smul.addr %s225, 32
        %s227 = scalar_lea.vmem [#allocation3], %s226
        %s228 = smul.u32 4, %s17
        %s229 = ssub.s32 10, %s228
        %p230 = scmp.lt.s32.totalorder %s229, 4
        %s231 = scalar_select %p230, %s229, 4
        %s232 = smul.u32 128, %s231
        %p233 = scmp.lt.s32.totalorder %s228, 9
        %s234 = scalar_select %p233, %s228, 9
        %s235 = smul.addr %s234, 8
        %s236 = scalar_lea.vmem %s0, %s235
        %s237 = smul.u32 4, %s17
        %s238 = ssub.s32 10, %s237
        %p239 = scmp.lt.s32.totalorder %s238, 4
        %s240 = scalar_select %p239, %s238, 4
        %s241 = smul.u32 128, %s240
        %s242 = smul.u32 4, %s17
        %s243 = ssub.s32 10, %s242
        %p244 = scmp.lt.s32.totalorder %s243, 4
        %s245 = scalar_select %p244, %s243, 4
        %s246 = smul.u32 128, %s245
        %v247 = vld [vmem:[%s236] sm:$0xff]
        %v248 = vld [vmem:[%s236 + $0x8] sm:$0xff]
        %v249 = vld [vmem:[%s236 + $0x10] sm:$0xff]
        %v250 = vld [vmem:[%s236 + $0x18] sm:$0xff]
        %v251 = vld [vmem:[%s1] sm:$0xff]
        %v252 = vld [vmem:[%s1 + $0x8] sm:$0xff]
        %v253 = vld [vmem:[%s1 + $0x10] sm:$0xff]
        %v254 = vld [vmem:[%s1 + $0x18] sm:$0xff]
        %v255 = vld [vmem:[%s1 + $0x20] sm:$0xff]
        %v256 = vld [vmem:[%s1 + $0x28] sm:$0xff]
        %v257 = vld [vmem:[%s1 + $0x30] sm:$0xff]
        %v258 = vld [vmem:[%s1 + $0x38] sm:$0xff]
        %v259 = vld [vmem:[%s1 + $0x40] sm:$0xff]
        %v260 = vld [vmem:[%s1 + $0x48] sm:$0xff]
        %v261 = vld [vmem:[%s1 + $0x50] sm:$0xff]
        %v262 = vld [vmem:[%s1 + $0x58] sm:$0xff]
        %v263 = vld [vmem:[%s1 + $0x60] sm:$0xff]
        %v264 = vld [vmem:[%s1 + $0x68] sm:$0xff]
        %v265 = vld [vmem:[%s1 + $0x70] sm:$0xff]
        %v266 = vld [vmem:[%s1 + $0x78] sm:$0xff]
        %v267 = vld [vmem:[%s2] sm:$0x1]
        %v269 = vlaneseq
        %v270 = vshrl.u32 %v269, 7
        %v271 = vsub.s32 0, %v270
        %v272 = vrot.slane %v267, %v271
        %274 = vmatprep.subr.mxu0 0.0
        %275 = vmatpush1.msra.mxu0 %v251
        %276 = vmatprep.subr.mxu0 0.0
        %277 = vmatpush1.msra.mxu0 %v252
        %278 = vmatprep.subr.mxu0 0.0
        %279 = vmatpush1.msra.mxu0 %v253
        %280 = vmatprep.subr.mxu0 0.0
        %281 = vmatpush1.msra.mxu0 %v254
        %282 = vmatprep.subr.mxu0 0.0
        %283 = vmatpush1.msra.mxu0 %v255
        %284 = vmatprep.subr.mxu0 0.0
        %285 = vmatpush1.msra.mxu0 %v256
        %286 = vmatprep.subr.mxu0 0.0
        %287 = vmatpush1.msra.mxu0 %v257
        %288 = vmatprep.subr.mxu0 0.0
        %289 = vmatpush1.msra.mxu0 %v258
        %290 = vmatprep.subr.mxu0 0.0
        %291 = vmatpush1.msra.mxu0 %v259
        %292 = vmatprep.subr.mxu0 0.0
        %293 = vmatpush1.msra.mxu0 %v260
        %294 = vmatprep.subr.mxu0 0.0
        %295 = vmatpush1.msra.mxu0 %v261
        %296 = vmatprep.subr.mxu0 0.0
        %297 = vmatpush1.msra.mxu0 %v262
        %298 = vmatprep.subr.mxu0 0.0
        %299 = vmatpush1.msra.mxu0 %v263
        %300 = vmatprep.subr.mxu0 0.0
        %301 = vmatpush1.msra.mxu0 %v264
        %302 = vmatprep.subr.mxu0 0.0
        %303 = vmatpush1.msra.mxu0 %v265
        %304 = vmatprep.subr.mxu0 0.0
        %305 = vmatpush1.msra.mxu0 %v266
        %306 = vmatprep.subr.mxu0 0.0
        %307 = vmatpush1.msra.mxu0 0.0
        %308 = vmatprep.subr.mxu0 0.0
        %309 = vmatpush1.msra.mxu0 0.0
        %310 = vmatprep.subr.mxu0 0.0
        %311 = vmatpush1.msra.mxu0 0.0
        %312 = vmatprep.subr.mxu0 0.0
        %313 = vmatpush1.msra.mxu0 0.0
        %314 = vmatprep.subr.mxu0 0.0
        %315 = vmatpush1.msra.mxu0 0.0
        %316 = vmatprep.subr.mxu0 0.0
        %317 = vmatpush1.msra.mxu0 0.0
        %318 = vmatprep.subr.mxu0 0.0
        %319 = vmatpush1.msra.mxu0 0.0
        %320 = vmatprep.subr.mxu0 0.0
        %321 = vmatpush1.msra.mxu0 0.0
        %322 = vmatprep.subr.mxu0 0.0
        %323 = vmatpush1.msra.mxu0 0.0
        %324 = vmatprep.subr.mxu0 0.0
        %325 = vmatpush1.msra.mxu0 0.0
        %326 = vmatprep.subr.mxu0 0.0
        %327 = vmatpush1.msra.mxu0 0.0
        %328 = vmatprep.subr.mxu0 0.0
        %329 = vmatpush1.msra.mxu0 0.0
        %330 = vmatprep.subr.mxu0 0.0
        %331 = vmatpush1.msra.mxu0 0.0
        %332 = vmatprep.subr.mxu0 0.0
        %333 = vmatpush1.msra.mxu0 0.0
        %334 = vmatprep.subr.mxu0 0.0
        %335 = vmatpush1.msra.mxu0 0.0
        %336 = vmatprep.subr.mxu0 0.0
        %337 = vmatpush1.msra.mxu0 0.0
        %338 = vmatprep.mubr.f32.mxu0 0.0
        %339 = vmatmul.mubr.f32.gmra.mrb[0].mxu0 %v247
        %v340 = vpop.f32.mrb[0].mxu0
        %v341 = vadd.f32 %v272, %v340
        %v342 = vpop.f32.mrb[0].mxu0
        %343 = vmatprep.mubr.f32.mxu0 0.0
        %344 = vmatmul.mubr.f32.gmra.mrb[0].mxu0 %v248
        %v345 = vpop.f32.mrb[0].mxu0
        %v346 = vadd.f32 %v272, %v345
        %v347 = vpop.f32.mrb[0].mxu0
        %348 = vmatprep.mubr.f32.mxu0 0.0
        %349 = vmatmul.mubr.f32.gmra.mrb[0].mxu0 %v249
        %v350 = vpop.f32.mrb[0].mxu0
        %v351 = vadd.f32 %v272, %v350
        %v352 = vpop.f32.mrb[0].mxu0
        %353 = vmatprep.mubr.f32.mxu0 0.0
        %354 = vmatmul.mubr.f32.gmra.mrb[0].mxu0 %v250
        %v355 = vpop.f32.mrb[0].mxu0
        %v356 = vadd.f32 %v272, %v355
        %v357 = vpop.f32.mrb[0].mxu0
        %358 = vdwg.mxu0
        %v359 = vmax.f32 %v341, 0.0
        %v360 = vmax.f32 %v346, 0.0
        %v361 = vmax.f32 %v351, 0.0
        %v362 = vmax.f32 %v356, 0.0
        %v363 = vld [vmem:[%s3] sm:$0xff]
        %v364 = vld [vmem:[%s3 + $0x8] sm:$0xff]
        %v365 = vld [vmem:[%s3 + $0x10] sm:$0xff]
        %v366 = vld [vmem:[%s3 + $0x18] sm:$0xff]
        %v367 = vld [vmem:[%s3 + $0x20] sm:$0xff]
        %v368 = vld [vmem:[%s3 + $0x28] sm:$0xff]
        %v369 = vld [vmem:[%s3 + $0x30] sm:$0xff]
        %v370 = vld [vmem:[%s3 + $0x38] sm:$0xff]
        %s371 = sld [smem:[#allocation2]]
        %v372 = vstv %s371
        %vm373 = vcmask 523264
        %v375 = vsel %vm373, %v359, 0
        %v378 = vsel %vm373, %v360, 0
        %v381 = vsel %vm373, %v361, 0
        %v384 = vsel %vm373, %v362, 0
        %386 = vmatprep.subr.mxu0 0.0
        %387 = vmatpush1.msra.mxu0 %v363
        %388 = vmatprep.subr.mxu0 0.0
        %389 = vmatpush1.msra.mxu0 %v364
        %390 = vmatprep.subr.mxu0 0.0
        %391 = vmatpush1.msra.mxu0 %v365
        %392 = vmatprep.subr.mxu0 0.0
        %393 = vmatpush1.msra.mxu0 %v366
        %394 = vmatprep.subr.mxu0 0.0
        %395 = vmatpush1.msra.mxu0 %v367
        %396 = vmatprep.subr.mxu0 0.0
        %397 = vmatpush1.msra.mxu0 %v368
        %398 = vmatprep.subr.mxu0 0.0
        %399 = vmatpush1.msra.mxu0 %v369
        %400 = vmatprep.subr.mxu0 0.0
        %401 = vmatpush1.msra.mxu0 %v370
        %402 = vmatprep.subr.mxu0 0.0
        %403 = vmatpush1.msra.mxu0 0.0
        %404 = vmatprep.subr.mxu0 0.0
        %405 = vmatpush1.msra.mxu0 0.0
        %406 = vmatprep.subr.mxu0 0.0
        %407 = vmatpush1.msra.mxu0 0.0
        %408 = vmatprep.subr.mxu0 0.0
        %409 = vmatpush1.msra.mxu0 0.0
        %410 = vmatprep.subr.mxu0 0.0
        %411 = vmatpush1.msra.mxu0 0.0
        %412 = vmatprep.subr.mxu0 0.0
        %413 = vmatpush1.msra.mxu0 0.0
        %414 = vmatprep.subr.mxu0 0.0
        %415 = vmatpush1.msra.mxu0 0.0
        %416 = vmatprep.subr.mxu0 0.0
        %417 = vmatpush1.msra.mxu0 0.0
        %418 = vmatprep.subr.mxu0 0.0
        %419 = vmatpush1.msra.mxu0 0.0
        %420 = vmatprep.subr.mxu0 0.0
        %421 = vmatpush1.msra.mxu0 0.0
        %422 = vmatprep.subr.mxu0 0.0
        %423 = vmatpush1.msra.mxu0 0.0
        %424 = vmatprep.subr.mxu0 0.0
        %425 = vmatpush1.msra.mxu0 0.0
        %426 = vmatprep.subr.mxu0 0.0
        %427 = vmatpush1.msra.mxu0 0.0
        %428 = vmatprep.subr.mxu0 0.0
        %429 = vmatpush1.msra.mxu0 0.0
        %430 = vmatprep.subr.mxu0 0.0
        %431 = vmatpush1.msra.mxu0 0.0
        %432 = vmatprep.subr.mxu0 0.0
        %433 = vmatpush1.msra.mxu0 0.0
        %434 = vmatprep.subr.mxu0 0.0
        %435 = vmatpush1.msra.mxu0 0.0
        %436 = vmatprep.subr.mxu0 0.0
        %437 = vmatpush1.msra.mxu0 0.0
        %438 = vmatprep.subr.mxu0 0.0
        %439 = vmatpush1.msra.mxu0 0.0
        %440 = vmatprep.subr.mxu0 0.0
        %441 = vmatpush1.msra.mxu0 0.0
        %442 = vmatprep.subr.mxu0 0.0
        %443 = vmatpush1.msra.mxu0 0.0
        %444 = vmatprep.subr.mxu0 0.0
        %445 = vmatpush1.msra.mxu0 0.0
        %446 = vmatprep.subr.mxu0 0.0
        %447 = vmatpush1.msra.mxu0 0.0
        %448 = vmatprep.subr.mxu0 0.0
        %449 = vmatpush1.msra.mxu0 0.0
        %450 = vmatprep.mubr.f32.mxu0 0.0
        %451 = vmatmul.mubr.f32.gmra.mrb[0].mxu0 %v375
        %v452 = vpop.f32.mrb[0].mxu0
        %v453 = vadd.f32 %v372, %v452
        %v454 = vpop.f32.mrb[0].mxu0
        %455 = vmatprep.mubr.f32.mxu0 0.0
        %456 = vmatmul.mubr.f32.gmra.mrb[0].mxu0 %v378
        %v457 = vpop.f32.mrb[0].mxu0
        %v458 = vadd.f32 %v372, %v457
        %v459 = vpop.f32.mrb[0].mxu0
        %460 = vmatprep.mubr.f32.mxu0 0.0
        %461 = vmatmul.mubr.f32.gmra.mrb[0].mxu0 %v381
        %v462 = vpop.f32.mrb[0].mxu0
        %v463 = vadd.f32 %v372, %v462
        %v464 = vpop.f32.mrb[0].mxu0
        %465 = vmatprep.mubr.f32.mxu0 0.0
        %466 = vmatmul.mubr.f32.gmra.mrb[0].mxu0 %v384
        %v467 = vpop.f32.mrb[0].mxu0
        %v468 = vadd.f32 %v372, %v467
        %v469 = vpop.f32.mrb[0].mxu0
        %470 = vdwg.mxu0
        %vm471 = vcmask 31744
        %472 = vst.msk [vmem:[%s227] sm:$0xff] %vm471, %v453
        %473 = vst.msk [vmem:[%s227 + $0x8] sm:$0xff] %vm471, %v458
        %474 = vst.msk [vmem:[%s227 + $0x10] sm:$0xff] %vm471, %v463
        %475 = vst.msk [vmem:[%s227 + $0x18] sm:$0xff] %vm471, %v468
        %s476 = sand.u32 %s135, 1
        %s477 = sand.u32 %s135, 1
        %s478 = smul.addr %s477, 32
        %s479 = scalar_lea.vmem [#allocation3], %s478
        // Predicated region
        $region41: #{edge_classifier_forward.1} parent=39 // pred_check
          %p480 = pneg %p145
        $region42: #{edge_classifier_forward.1} parent=39 // pred_check_branch
          %482 = sbr.rel (%p480) target = $region44
        $region43: #{edge_classifier_forward.1} parent=39 // pred_region
          %s483 = smul.u32 4, %s17
          %s484 = ssub.s32 10, %s483
          %p485 = scmp.lt.s32.totalorder %s484, 4
          %s486 = scalar_select %p485, %s484, 4
          %s487 = smul.u32 128, %s486
          %p488 = scmp.ne.s32.totalorder 0, %s487
          %s489 = smul.addr %s483, 8
          %s490 = scalar_lea.vmem %s5, %s489
          // Predicated region
          $region45: #{edge_classifier_forward.1} parent=43 // pred_check
            %p491 = pneg %p488
          $region46: #{edge_classifier_forward.1} parent=43 // pred_check_branch
            %493 = sbr.rel (%p491) target = $region48
          $region47: #{edge_classifier_forward.1} parent=43 // pred_region
            // Predicated region
            $region49: #{edge_classifier_forward.1} parent=47 // pred_check
              _
            $region50: #{edge_classifier_forward.1} parent=47 // pred_check_branch
              %495 = sbr.rel (0) target = $region52
            $region51: #{edge_classifier_forward.1} parent=47 // pred_region
              // Predicated region
              $region71: #{edge_classifier_forward.1} parent=51 // pred_check
                _
              $region72: #{edge_classifier_forward.1} parent=51 // pred_check_branch
                %550 = sbr.rel (0) target = $region74
              $region73: #{edge_classifier_forward.1} parent=51 // pred_region
                %s551 = sshrl.u32 %s486, 2
                // While loop
                $region75: #{edge_classifier_forward.1} parent=73 // loop_pre_header
                  _
                $region76: #{edge_classifier_forward.1} parent=73 // loop_header
                  %s553 = sphi 0, %s555
                  %p554 = scmp.ge.s32.totalorder %s553, %s551
                  %s558 = sphi 0, %s571
                  %s559 = sphi %s479, %s574
                  %s560 = sphi %s490, %s575
                $region77: #{edge_classifier_forward.1} parent=73 // loop_header_branch
                  %557 = sbr.rel (%p554) target = $region81
                $region78: #{edge_classifier_forward.1} parent=73 // loop_body
                  %v561 = vld [vmem:[%s559] sm:$0xff]
                  %562 = vst [vmem:[%s560] sm:$0xff] %v561
                  %v563 = vld [vmem:[%s559 + $0x8] sm:$0xff]
                  %564 = vst [vmem:[%s560 + $0x8] sm:$0xff] %v563
                  %v565 = vld [vmem:[%s559 + $0x10] sm:$0xff]
                  %566 = vst [vmem:[%s560 + $0x10] sm:$0xff] %v565
                  %v567 = vld [vmem:[%s559 + $0x18] sm:$0xff]
                  %568 = vst [vmem:[%s560 + $0x18] sm:$0xff] %v567
                  %s569 = sadd.s32 1, %s558
                  %p570 = scmp.ge.s32.totalorder %s569, %s551
                  %s571 = scalar_select %p570, 0, %s569
                  %s572 = smul.u32 %s571, 32
                  %s573 = smul.u32 %s571, 32
                  %s574 = scalar_lea.vmem %s479, %s572 [#allocation3]
                  %s575 = scalar_lea.vmem %s490, %s573
                $region79: #{edge_classifier_forward.1} parent=73 // loop_footer
                  %s555 = sadd.s32 %s553, 1
                $region80: #{edge_classifier_forward.1} parent=73 // loop_footer_branch
                  %552 = sbr.rel target = $region76
                $region81: #{edge_classifier_forward.1} parent=73 // loop_exit
                  _
                %s576 = sshrl.u32 %s486, 2
                %s577 = sand.u32 %s486, 3
                %s578 = smul.u32 %s576, 4
                %s579 = smul.u32 8, %s578
                %s580 = scalar_lea.vmem %s479, %s579 [#allocation3]
                %s581 = smul.u32 8, %s578
                %s582 = scalar_lea.vmem %s490, %s581
                // While loop
                $region82: #{edge_classifier_forward.1} parent=73 // loop_pre_header
                  _
                $region83: #{edge_classifier_forward.1} parent=73 // loop_header
                  %s584 = sphi 0, %s586
                  %p585 = scmp.ge.s32.totalorder %s584, %s577
                  %s589 = sphi 0, %s596
                  %s590 = sphi %s580, %s599
                  %s591 = sphi %s582, %s600
                $region84: #{edge_classifier_forward.1} parent=73 // loop_header_branch
                  %588 = sbr.rel (%p585) target = $region88
                $region85: #{edge_classifier_forward.1} parent=73 // loop_body
                  %v592 = vld [vmem:[%s590] sm:$0xff]
                  %593 = vst [vmem:[%s591] sm:$0xff] %v592
                  %s594 = sadd.s32 1, %s589
                  %p595 = scmp.ge.s32.totalorder %s594, %s577
                  %s596 = scalar_select %p595, 0, %s594
                  %s597 = smul.u32 %s596, 8
                  %s598 = smul.u32 %s596, 8
                  %s599 = scalar_lea.vmem %s580, %s597 [#allocation3]
                  %s600 = scalar_lea.vmem %s582, %s598
                $region86: #{edge_classifier_forward.1} parent=73 // loop_footer
                  %s586 = sadd.s32 %s584, 1
                $region87: #{edge_classifier_forward.1} parent=73 // loop_footer_branch
                  %583 = sbr.rel target = $region83
                $region88: #{edge_classifier_forward.1} parent=73 // loop_exit
                  _
              $region74: #{edge_classifier_forward.1} parent=51 // pred_fallthru
                _
              // Predicated region
              $region89: #{edge_classifier_forward.1} parent=51 // pred_check
                _
              $region90: #{edge_classifier_forward.1} parent=51 // pred_check_branch
                %602 = sbr.rel target = $region92
              $region91: #{edge_classifier_forward.1} parent=51 // pred_region
                _
              $region92: #{edge_classifier_forward.1} parent=51 // pred_fallthru
                _
            $region52: #{edge_classifier_forward.1} parent=47 // pred_fallthru
              _
            // Predicated region
            $region53: #{edge_classifier_forward.1} parent=47 // pred_check
              _
            $region54: #{edge_classifier_forward.1} parent=47 // pred_check_branch
              %497 = sbr.rel target = $region56
            $region55: #{edge_classifier_forward.1} parent=47 // pred_region
              %s499 = sshrl.u32 %s486, 2
              // While loop
              $region57: #{edge_classifier_forward.1} parent=55 // loop_pre_header
                _
              $region58: #{edge_classifier_forward.1} parent=55 // loop_header
                %s501 = sphi 0, %s503
                %p502 = scmp.ge.s32.totalorder %s501, %s499
                %s506 = sphi 0, %s519
                %s507 = sphi %s479, %s522
                %s508 = sphi %s490, %s523
              $region59: #{edge_classifier_forward.1} parent=55 // loop_header_branch
                %505 = sbr.rel (%p502) target = $region63
              $region60: #{edge_classifier_forward.1} parent=55 // loop_body
                %v509 = vld [vmem:[%s507] sm:$0xff]
                %510 = vst [vmem:[%s508] sm:$0xff] %v509
                %v511 = vld [vmem:[%s507 + $0x8] sm:$0xff]
                %512 = vst [vmem:[%s508 + $0x8] sm:$0xff] %v511
                %v513 = vld [vmem:[%s507 + $0x10] sm:$0xff]
                %514 = vst [vmem:[%s508 + $0x10] sm:$0xff] %v513
                %v515 = vld [vmem:[%s507 + $0x18] sm:$0xff]
                %516 = vst [vmem:[%s508 + $0x18] sm:$0xff] %v515
                %s517 = sadd.s32 1, %s506
                %p518 = scmp.ge.s32.totalorder %s517, %s499
                %s519 = scalar_select %p518, 0, %s517
                %s520 = smul.u32 %s519, 32
                %s521 = smul.u32 %s519, 32
                %s522 = scalar_lea.vmem %s479, %s520 [#allocation3]
                %s523 = scalar_lea.vmem %s490, %s521
              $region61: #{edge_classifier_forward.1} parent=55 // loop_footer
                %s503 = sadd.s32 %s501, 1
              $region62: #{edge_classifier_forward.1} parent=55 // loop_footer_branch
                %500 = sbr.rel target = $region58
              $region63: #{edge_classifier_forward.1} parent=55 // loop_exit
                _
              %s524 = sshrl.u32 %s486, 2
              %s525 = sand.u32 %s486, 3
              %s526 = smul.u32 %s524, 4
              %s527 = smul.u32 8, %s526
              %s528 = scalar_lea.vmem %s479, %s527 [#allocation3]
              %s529 = smul.u32 8, %s526
              %s530 = scalar_lea.vmem %s490, %s529
              // While loop
              $region64: #{edge_classifier_forward.1} parent=55 // loop_pre_header
                _
              $region65: #{edge_classifier_forward.1} parent=55 // loop_header
                %s532 = sphi 0, %s534
                %p533 = scmp.ge.s32.totalorder %s532, %s525
                %s537 = sphi 0, %s544
                %s538 = sphi %s528, %s547
                %s539 = sphi %s530, %s548
              $region66: #{edge_classifier_forward.1} parent=55 // loop_header_branch
                %536 = sbr.rel (%p533) target = $region70
              $region67: #{edge_classifier_forward.1} parent=55 // loop_body
                %v540 = vld [vmem:[%s538] sm:$0xff]
                %541 = vst [vmem:[%s539] sm:$0xff] %v540
                %s542 = sadd.s32 1, %s537
                %p543 = scmp.ge.s32.totalorder %s542, %s525
                %s544 = scalar_select %p543, 0, %s542
                %s545 = smul.u32 %s544, 8
                %s546 = smul.u32 %s544, 8
                %s547 = scalar_lea.vmem %s528, %s545 [#allocation3]
                %s548 = scalar_lea.vmem %s530, %s546
              $region68: #{edge_classifier_forward.1} parent=55 // loop_footer
                %s534 = sadd.s32 %s532, 1
              $region69: #{edge_classifier_forward.1} parent=55 // loop_footer_branch
                %531 = sbr.rel target = $region65
              $region70: #{edge_classifier_forward.1} parent=55 // loop_exit
                _
            $region56: #{edge_classifier_forward.1} parent=47 // pred_fallthru
              _
          $region48: #{edge_classifier_forward.1} parent=43 // pred_fallthru
            _
          %603 = vnop
        $region44: #{edge_classifier_forward.1} parent=39 // pred_fallthru
          _
      $region40: #{edge_classifier_forward.1} parent=5 // pred_fallthru
        _
      %p604 = scmp.le.s32.totalorder 2, %s12
      // Predicated region
      $region93: #{edge_classifier_forward.1} parent=5 // pred_check
        %p605 = pneg %p604
      $region94: #{edge_classifier_forward.1} parent=5 // pred_check_branch
        %607 = sbr.rel (%p605) target = $region96
      $region95: #{edge_classifier_forward.1} parent=5 // pred_region
        %s608 = ssub.s32 %s12, 2
        // Predicated region
        $region97: #{edge_classifier_forward.1} parent=95 // pred_check
          %p609 = pneg %p151
        $region98: #{edge_classifier_forward.1} parent=95 // pred_check_branch
          %611 = sbr.rel (%p609) target = $region100
        $region99: #{edge_classifier_forward.1} parent=95 // pred_region
          %s612 = sand.u32 %s136, 1
          %s613 = sand.u32 %s136, 1
          %s614 = smul.addr %s613, 32
          %s615 = scalar_lea.vmem [#allocation3], %s614
        $region100: #{edge_classifier_forward.1} parent=95 // pred_fallthru
          _
      $region96: #{edge_classifier_forward.1} parent=5 // pred_fallthru
        _
    $region6: #{edge_classifier_forward.1} parent=1 // loop_footer
      %s16 = sadd.s32 1, %s12
    $region7: #{edge_classifier_forward.1} parent=1 // loop_footer_branch
      %11 = sbr.rel target = $region3
    $region8: #{edge_classifier_forward.1} parent=1 // loop_exit
      _

</llo_original>
